<compile_context>
chip_gen: v6e
topology: v6e:2x2x1
jax: 0.10.0
libtpu: 0.0.40
codegen_flags: <defaults>
</compile_context>

<pallas_src>
import functools

import jax
import jax.numpy as jnp
from jax.experimental import pallas as pl
from jax.experimental.pallas import tpu as pltpu

EPS = 1e-5    # nn.BatchNorm2d default eps
LANE = 128


def _round_up(x, m):
    return (x + m - 1) // m * m


# ----------------------------------------------------------------------------
# Pallas kernels
# ----------------------------------------------------------------------------
def _conv_stats_kernel(cols_ref, w_ref, scale_ref, y_ref, stats_ref):
    """Pass A: im2col matmul + per-channel scale; emit raw y and BN partials.

    cols_ref : (TILE_M, K)   bf16 im2col patches, K = Cin*9
    w_ref    : (K, Cp)       bf16 flattened weights, Cout zero-padded to Cp
    scale_ref: (1, Cp)       f32 per-output-channel scale (pr*sel, or ones)
    y_ref    : (TILE_M, Cp)  f32 raw (scaled) conv output
    stats_ref: (1, 2, Cp)    f32 per-tile [sum ; sum-of-squares] over rows
    """
    y = jnp.dot(cols_ref[...], w_ref[...], preferred_element_type=jnp.float32)
    y = y * scale_ref[...]
    y_ref[...] = y
    s1 = jnp.sum(y, axis=0, keepdims=True)        # (1, Cp)
    s2 = jnp.sum(y * y, axis=0, keepdims=True)    # (1, Cp)
    stats_ref[0] = jnp.concatenate([s1, s2], axis=0)


def _bn_relu_kernel(y_ref, ab_ref, out_ref):
    """Pass B: fused BatchNorm affine + ReLU:  out = max(y*a + b, 0)."""
    a = ab_ref[0:1, :]
    b = ab_ref[1:2, :]
    out_ref[...] = jnp.maximum(y_ref[...] * a + b, 0.0)


# ----------------------------------------------------------------------------
# conv + BN + ReLU wrapper (shared by pattern==0 and i==1 branches)
# ----------------------------------------------------------------------------
@functools.partial(jax.jit, static_argnames=("tile_m",))
def _conv_bn_relu(w, gamma, beta, x, channel_scale, *, tile_m=1024):
    """conv3x3(stride1,pad1,no-bias) -> *channel_scale -> BN(batch stats) -> ReLU.

    x: (N, Cin, H, W) f32, w: (Cout, Cin, 3, 3) f32,
    channel_scale/gamma/beta: (Cout,) f32.  Returns (N, Cout, H, W) f32.
    """
    n, cin, h, wd = x.shape
    cout = w.shape[0]
    k = cin * 9
    cp = _round_up(cout, LANE)

    # ---- im2col (plain-JAX glue), in bf16 to halve HBM traffic of the patches.
    # TODO(synk): build the 9 taps inside the kernel from an NHWC tile (manual
    #             DMA with halo rows) to remove the remaining 9x im2col blow-up.
    xb = x.astype(jnp.bfloat16)
    xp = jnp.pad(xb, ((0, 0), (0, 0), (1, 1), (1, 1)))
    taps = [xp[:, :, kh:kh + h, kw:kw + wd] for kh in range(3) for kw in range(3)]
    cols = jnp.stack(taps, axis=2)                            # (N, Cin, 9, H, W)
    cols = cols.transpose(0, 3, 4, 1, 2).reshape(n * h * wd, k)

    m = n * h * wd
    tm = min(tile_m, _round_up(m, 8))
    m_pad = _round_up(m, tm)
    if m_pad != m:
        cols = jnp.pad(cols, ((0, m_pad - m), (0, 0)))        # zero rows: stats unaffected
    num_tiles = m_pad // tm

    # ---- weights: (Cout, Cin*9) -> (K, Cp), zero-padded lanes, bf16 for the MXU.
    wmat = w.reshape(cout, k).T
    wmat = jnp.pad(wmat, ((0, 0), (0, cp - cout))).astype(jnp.bfloat16)
    scale_p = jnp.pad(channel_scale.astype(jnp.float32), (0, cp - cout)).reshape(1, cp)

    vmem_cap = 48 * 1024 * 1024   # leaves headroom under v7x's 64 MiB physical VMEM

    # ---- pass A: tiled matmul + per-tile BN partial sums (fully parallel over M).
    y, stats = pl.pallas_call(
        _conv_stats_kernel,
        grid=(num_tiles,),
        in_specs=[
            pl.BlockSpec((tm, k), lambda i: (i, 0)),
            pl.BlockSpec((k, cp), lambda i: (0, 0)),
            pl.BlockSpec((1, cp), lambda i: (0, 0)),
        ],
        out_specs=(
            pl.BlockSpec((tm, cp), lambda i: (i, 0)),
            pl.BlockSpec((1, 2, cp), lambda i: (i, 0, 0)),
        ),
        out_shape=(
            jax.ShapeDtypeStruct((m_pad, cp), jnp.float32),
            jax.ShapeDtypeStruct((num_tiles, 2, cp), jnp.float32),
        ),
        compiler_params=pltpu.CompilerParams(
            dimension_semantics=("parallel",), vmem_limit_bytes=vmem_cap),
    )(cols, wmat, scale_p)

    # ---- finalize BN stats (tiny) and fold into a single affine (a, b), f32.
    totals = jnp.sum(stats, axis=0)                           # (2, Cp)
    mean = totals[0] / m                                      # true M (padded rows are zero)
    var = jnp.maximum(totals[1] / m - mean * mean, 0.0)
    inv_std = jax.lax.rsqrt(var + EPS)
    gamma_p = jnp.pad(gamma.astype(jnp.float32), (0, cp - cout))
    beta_p = jnp.pad(beta.astype(jnp.float32), (0, cp - cout))
    a = gamma_p * inv_std
    b = beta_p - mean * a
    ab = jnp.stack([a, b], axis=0)                            # (2, Cp)

    # ---- pass B: normalize + ReLU, written in place over y.
    out_flat = pl.pallas_call(
        _bn_relu_kernel,
        grid=(num_tiles,),
        in_specs=[
            pl.BlockSpec((tm, cp), lambda i: (i, 0)),
            pl.BlockSpec((2, cp), lambda i: (0, 0)),
        ],
        out_specs=pl.BlockSpec((tm, cp), lambda i: (i, 0)),
        out_shape=jax.ShapeDtypeStruct((m_pad, cp), jnp.float32),
        input_output_aliases={0: 0},
        compiler_params=pltpu.CompilerParams(
            dimension_semantics=("parallel",), vmem_limit_bytes=vmem_cap),
    )(y, ab)

    # NHWC-flat -> NCHW to match the PyTorch module's output layout.
    # TODO(synk): drop this transpose (an extra HBM round trip) if downstream
    #             consumers can take NHWC directly.
    out = out_flat[:m, :cout].reshape(n, h, wd, cout).transpose(0, 3, 1, 2)
    return out


# ----------------------------------------------------------------------------
# Module-equivalent API
# ----------------------------------------------------------------------------
def init_params(key, in_features, out_features):
    """kaiming_normal_(mode='fan_out', nonlinearity='relu')-style init + fresh BN."""
    std = (2.0 / (out_features * 9)) ** 0.5
    w = jax.random.normal(key, (out_features, in_features, 3, 3), jnp.float32) * std
    return dict(
        weights=w,
        bn_gamma=jnp.ones((out_features,), jnp.float32),
        bn_beta=jnp.zeros((out_features,), jnp.float32),
    )


def convolution1_forward(params, inputs, sel=None, pr=None, i=None, pattern=None,
                         tile_m=1024):
    w = params["weights"]
    cout, cin = w.shape[0], w.shape[1]

    if pattern == 0:
        scale = jnp.ones((cout,), jnp.float32)
        return _conv_bn_relu(w, params["bn_gamma"], params["bn_beta"],
                             inputs, scale, tile_m=tile_m)

    if i == 0:
        # Few-KB weight reductions: plain jnp (a dedicated grid=(1,) kernel is
        # pure launch/DMA overhead per the perf review).
        wsum = jnp.sum(w, axis=(1, 2, 3))                     # (Cout,)
        sel_avg = (wsum / 9.0).reshape(1, cout)               # sum over Cin of 3x3 mean
        pr_avg = (wsum / (cin * 9.0)).reshape(1, cout)        # mean over (Cin,3,3)
        return sel_avg, pr_avg

    if i == 1:
        if sel is None or pr is None:
            raise ValueError("sel and pr must be provided for the i==1 branch")
        # conv(x, W*pr) * sel == conv(x, W) * (pr*sel): both are per-output-channel scalars.
        scale = (pr.reshape(-1) * sel.reshape(-1)).astype(jnp.float32)
        return _conv_bn_relu(w, params["bn_gamma"], params["bn_beta"],
                             inputs, scale, tile_m=tile_m)

    raise ValueError(f"unsupported branch: pattern={pattern}, i={i}")


if __name__ == "__main__":
    key = jax.random.PRNGKey(0)
    kw, kx, ksel, kpr = jax.random.split(key, 4)

    in_features, out_features = 4, 8
    params = init_params(kw, in_features, out_features)
    x = jax.random.normal(kx, (2, in_features, 16, 16), jnp.float32)

    # pattern == 0: conv + BN + ReLU
    out0 = convolution1_forward(params, x, pattern=0)

    # i == 0: weight averages
    sel_avg, pr_avg = convolution1_forward(params, x, i=0, pattern=1)

    # i == 1: pr-scaled weights, sel-scaled output, BN + ReLU
    sel = jax.random.uniform(ksel, (out_features,), jnp.float32)
    pr = jax.random.uniform(kpr, (out_features,), jnp.float32)
    out1 = convolution1_forward(params, x, sel=sel, pr=pr, i=1, pattern=1)

    jax.block_until_ready((out0, sel_avg, pr_avg, out1))

    assert out0.shape == (2, out_features, 16, 16)
    assert out1.shape == (2, out_features, 16, 16)
    assert sel_avg.shape == (1, out_features) and pr_avg.shape == (1, out_features)

    # Loose numerical check of the pattern==0 branch against a plain-XLA
    # reference (bf16 MXU path => loose absolute tolerance).
    ref = jax.lax.conv_general_dilated(
        x, params["weights"], window_strides=(1, 1), padding=((1, 1), (1, 1)),
        dimension_numbers=("NCHW", "OIHW", "NCHW"))
    mu = jnp.mean(ref, axis=(0, 2, 3), keepdims=True)
    va = jnp.var(ref, axis=(0, 2, 3), keepdims=True)
    ref_bn = jnp.maximum((ref - mu) * jax.lax.rsqrt(va + EPS), 0.0)
    err = float(jnp.max(jnp.abs(out0 - ref_bn)))
    assert err < 0.2, f"max abs err {err}"

    print("KERNEL_OK")
</pallas_src>

<mosaic_0001>
module attributes {stable_mosaic.version = 11 : i64} {
  func.func @_bn_relu_kernel(%arg0: i32, %arg1: memref<512x128xf32, #tpu.memory_space<vmem>>, %arg2: memref<2x128xf32, #tpu.memory_space<vmem>>, %arg3: memref<512x128xf32, #tpu.memory_space<vmem>>) attributes {dimension_semantics = [#tpu.dimension_semantics<parallel>], iteration_bounds = array<i64: 1>, scalar_prefetch = 0 : i64, scratch_operands = 0 : i64, tpu.core_type = #tpu.core_type<tc>, window_params = [{transform_indices = @transform_0, window_bounds = array<i64: 512, 128>}, {pipeline_mode = #tpu.pipeline_mode<synchronous>, transform_indices = @transform_1, window_bounds = array<i64: 2, 128>}, {transform_indices = @transform_2, window_bounds = array<i64: 512, 128>}]} {
    %c0 = arith.constant 0 : index
    %c0_0 = arith.constant 0 : index
    %0 = vector.load %arg2[%c0, %c0_0] : memref<2x128xf32, #tpu.memory_space<vmem>>, vector<1x128xf32>
    %c1 = arith.constant 1 : index
    %c0_1 = arith.constant 0 : index
    %1 = vector.load %arg2[%c1, %c0_1] : memref<2x128xf32, #tpu.memory_space<vmem>>, vector<1x128xf32>
    %c0_2 = arith.constant 0 : index
    %c0_3 = arith.constant 0 : index
    %2 = vector.load %arg1[%c0_2, %c0_3] : memref<512x128xf32, #tpu.memory_space<vmem>>, vector<512x128xf32>
    %3 = vector.broadcast %0 : vector<1x128xf32> to vector<512x128xf32>
    %4 = arith.mulf %2, %3 : vector<512x128xf32>
    %5 = vector.broadcast %1 : vector<1x128xf32> to vector<512x128xf32>
    %6 = arith.addf %4, %5 : vector<512x128xf32>
    %cst = arith.constant 0.000000e+00 : f32
    %7 = vector.broadcast %cst : f32 to vector<512x128xf32>
    %8 = arith.maximumf %6, %7 : vector<512x128xf32>
    %c0_4 = arith.constant 0 : index
    %c0_5 = arith.constant 0 : index
    %9 = vector.load %arg3[%c0_4, %c0_5] : memref<512x128xf32, #tpu.memory_space<vmem>>, vector<512x128xf32>
    tpu.vector_store %arg3[%c0_4, %c0_5], %8 {strides = array<i32>} : memref<512x128xf32, #tpu.memory_space<vmem>>, vector<512x128xf32>,
    return
  }
  func.func @transform_0(%arg0: i32) -> (i32, i32) {
    %c0_i32 = arith.constant 0 : i32
    %c0_i32_0 = arith.constant 0 : i32
    return %arg0, %c0_i32 : i32, i32
  }
  func.func @transform_1(%arg0: i32) -> (i32, i32) {
    %c0_i32 = arith.constant 0 : i32
    %c0_i32_0 = arith.constant 0 : i32
    %c0_i32_1 = arith.constant 0 : i32
    return %c0_i32, %c0_i32_0 : i32, i32
  }
  func.func @transform_2(%arg0: i32) -> (i32, i32) {
    %c0_i32 = arith.constant 0 : i32
    %c0_i32_0 = arith.constant 0 : i32
    return %arg0, %c0_i32 : i32, i32
  }
}

module attributes {stable_mosaic.version = 11 : i64} {
  func.func @_conv_stats_kernel(%arg0: i32, %arg1: memref<512x36xbf16, #tpu.memory_space<vmem>>, %arg2: memref<36x128xbf16, #tpu.memory_space<vmem>>, %arg3: memref<1x128xf32, #tpu.memory_space<vmem>>, %arg4: memref<512x128xf32, #tpu.memory_space<vmem>>, %arg5: memref<1x2x128xf32, #tpu.memory_space<vmem>>) attributes {dimension_semantics = [#tpu.dimension_semantics<parallel>], iteration_bounds = array<i64: 1>, scalar_prefetch = 0 : i64, scratch_operands = 0 : i64, tpu.core_type = #tpu.core_type<tc>, window_params = [{transform_indices = @transform_0, window_bounds = array<i64: 512, 36>}, {pipeline_mode = #tpu.pipeline_mode<synchronous>, transform_indices = @transform_1, window_bounds = array<i64: 36, 128>}, {pipeline_mode = #tpu.pipeline_mode<synchronous>, transform_indices = @transform_2, window_bounds = array<i64: 1, 128>}, {transform_indices = @transform_3, window_bounds = array<i64: 512, 128>}, {transform_indices = @transform_4, window_bounds = array<i64: 1, 2, 128>}]} {
    %c0 = arith.constant 0 : index
    %c0_0 = arith.constant 0 : index
    %0 = vector.load %arg1[%c0, %c0_0] : memref<512x36xbf16, #tpu.memory_space<vmem>>, vector<512x36xbf16>
    %c0_1 = arith.constant 0 : index
    %c0_2 = arith.constant 0 : index
    %1 = vector.load %arg2[%c0_1, %c0_2] : memref<36x128xbf16, #tpu.memory_space<vmem>>, vector<36x128xbf16>
    %cst = arith.constant dense<0.000000e+00> : vector<512x128xf32>
    %2 = tpu.matmul %0, %1, %cst {dimension_numbers = #tpu.dot_dimension_numbers<[1], [0], [0], [1], [0, 0, 1, 1], [], []>} : vector<512x36xbf16>, vector<36x128xbf16>, vector<512x128xf32> -> vector<512x128xf32>
    %c0_3 = arith.constant 0 : index
    %c0_4 = arith.constant 0 : index
    %3 = vector.load %arg3[%c0_3, %c0_4] : memref<1x128xf32, #tpu.memory_space<vmem>>, vector<1x128xf32>
    %4 = vector.broadcast %3 : vector<1x128xf32> to vector<512x128xf32>
    %5 = arith.mulf %2, %4 : vector<512x128xf32>
    %c0_5 = arith.constant 0 : index
    %c0_6 = arith.constant 0 : index
    %6 = vector.load %arg4[%c0_5, %c0_6] : memref<512x128xf32, #tpu.memory_space<vmem>>, vector<512x128xf32>
    tpu.vector_store %arg4[%c0_5, %c0_6], %5 {strides = array<i32>} : memref<512x128xf32, #tpu.memory_space<vmem>>, vector<512x128xf32>,
    %cst_7 = arith.constant dense<0.000000e+00> : vector<128xf32>
    %7 = vector.multi_reduction <add>, %5, %cst_7 [0] : vector<512x128xf32> to vector<128xf32>
    %8 = vector.shape_cast %7 : vector<128xf32> to vector<1x128xf32>
    %9 = arith.mulf %5, %5 : vector<512x128xf32>
    %cst_8 = arith.constant dense<0.000000e+00> : vector<128xf32>
    %10 = vector.multi_reduction <add>, %9, %cst_8 [0] : vector<512x128xf32> to vector<128xf32>
    %11 = vector.shape_cast %10 : vector<128xf32> to vector<1x128xf32>
    %12 = tpu.concatenate %8, %11 in 0 : vector<1x128xf32>, vector<1x128xf32> -> vector<2x128xf32>
    %c0_9 = arith.constant 0 : index
    %c0_10 = arith.constant 0 : index
    %c0_11 = arith.constant 0 : index
    %13 = vector.load %arg5[%c0_9, %c0_10, %c0_11] : memref<1x2x128xf32, #tpu.memory_space<vmem>>, vector<1x2x128xf32>
    %14 = vector.shape_cast %13 : vector<1x2x128xf32> to vector<2x128xf32>
    %15 = vector.shape_cast %12 : vector<2x128xf32> to vector<1x2x128xf32>
    tpu.vector_store %arg5[%c0_9, %c0_10, %c0_11], %15 {strides = array<i32>} : memref<1x2x128xf32, #tpu.memory_space<vmem>>, vector<1x2x128xf32>,
    return
  }
  func.func @transform_0(%arg0: i32) -> (i32, i32) {
    %c0_i32 = arith.constant 0 : i32
    %c0_i32_0 = arith.constant 0 : i32
    return %arg0, %c0_i32 : i32, i32
  }
  func.func @transform_1(%arg0: i32) -> (i32, i32) {
    %c0_i32 = arith.constant 0 : i32
    %c0_i32_0 = arith.constant 0 : i32
    %c0_i32_1 = arith.constant 0 : i32
    return %c0_i32, %c0_i32_0 : i32, i32
  }
  func.func @transform_2(%arg0: i32) -> (i32, i32) {
    %c0_i32 = arith.constant 0 : i32
    %c0_i32_0 = arith.constant 0 : i32
    %c0_i32_1 = arith.constant 0 : i32
    return %c0_i32, %c0_i32_0 : i32, i32
  }
  func.func @transform_3(%arg0: i32) -> (i32, i32) {
    %c0_i32 = arith.constant 0 : i32
    %c0_i32_0 = arith.constant 0 : i32
    return %arg0, %c0_i32 : i32, i32
  }
  func.func @transform_4(%arg0: i32) -> (i32, i32, i32) {
    %c0_i32 = arith.constant 0 : i32
    %c0_i32_0 = arith.constant 0 : i32
    %c0_i32_1 = arith.constant 0 : i32
    return %arg0, %c0_i32, %c0_i32_0 : i32, i32, i32
  }
}

</mosaic_0001>

<llo_original>
// kernel: _conv_bn_relu.3
$region0: #{_conv_bn_relu.3}
  #allocation0 [shape = 'u32[]', space=smem, size = 0x4, offset = 0x4, fixed_abs, tag = 'smem constant byte address 0x4 - core index']
  #allocation1 [shape = 'u32[144,128]{1,0:T(1,128)}', space=vmem, size = 0x12000, scoped, tag = 'internal scratch']
  %s0 = inlined_call_operand.vmem [shape: f32[512,128], index: 0, kind: input, shape index: {}, may-alias: {0,2}]
  %s1 = inlined_call_operand.vmem [shape: f32[2,128], index: 1, kind: input, shape index: {}]
  %s2 = inlined_call_operand.vmem [shape: f32[512,128], index: 2, kind: output, shape index: {}, may-alias: {0,2}]
  %s3 = sld [smem:[#allocation0]]
  $region18: #{_conv_bn_relu.3} parent=0
    _
  %s5 = ssub.s32 1, %s3
  %s6 = scalar_select 0, %s5, %s3
  // Predicated region
  $region2: #{_conv_bn_relu.3} parent=0 // pred_check
    _
  $region3: #{_conv_bn_relu.3} parent=0 // pred_check_branch
    %8 = sbr.rel (0) target = $region5
  $region4: #{_conv_bn_relu.3} parent=0 // pred_region
    _
  $region5: #{_conv_bn_relu.3} parent=0 // pred_fallthru
    _
  // Predicated region
  $region6: #{_conv_bn_relu.3} parent=0 // pred_check
    _
  $region7: #{_conv_bn_relu.3} parent=0 // pred_check_branch
    %10 = sbr.rel (0) target = $region9
  $region8: #{_conv_bn_relu.3} parent=0 // pred_region
    _
  $region9: #{_conv_bn_relu.3} parent=0 // pred_fallthru
    _
  %v11 = vld [vmem:[%s1] sm:$0x1]
  %v12 = vld [vmem:[%s1 + $0x1] sm:$0x1]
  %v13 = vld [vmem:[%s0] sm:$0xff]
  %v14 = vld [vmem:[%s0 + $0x8] sm:$0xff]
  %v15 = vld [vmem:[%s0 + $0x10] sm:$0xff]
  %v16 = vld [vmem:[%s0 + $0x18] sm:$0xff]
  %v17 = vld [vmem:[%s0 + $0x20] sm:$0xff]
  %v18 = vld [vmem:[%s0 + $0x28] sm:$0xff]
  %v19 = vld [vmem:[%s0 + $0x30] sm:$0xff]
  %v20 = vld [vmem:[%s0 + $0x38] sm:$0xff]
  %v21 = vld [vmem:[%s0 + $0x40] sm:$0xff]
  %v22 = vld [vmem:[%s0 + $0x48] sm:$0xff]
  %v23 = vld [vmem:[%s0 + $0x50] sm:$0xff]
  %v24 = vld [vmem:[%s0 + $0x58] sm:$0xff]
  %v25 = vld [vmem:[%s0 + $0x60] sm:$0xff]
  %v26 = vld [vmem:[%s0 + $0x68] sm:$0xff]
  %v27 = vld [vmem:[%s0 + $0x70] sm:$0xff]
  %v28 = vld [vmem:[%s0 + $0x78] sm:$0xff]
  %v29 = vld [vmem:[%s0 + $0x80] sm:$0xff]
  %v30 = vld [vmem:[%s0 + $0x88] sm:$0xff]
  %v31 = vld [vmem:[%s0 + $0x90] sm:$0xff]
  %v32 = vld [vmem:[%s0 + $0x98] sm:$0xff]
  %v33 = vld [vmem:[%s0 + $0xa0] sm:$0xff]
  %v34 = vld [vmem:[%s0 + $0xa8] sm:$0xff]
  %v35 = vld [vmem:[%s0 + $0xb0] sm:$0xff]
  %v36 = vld [vmem:[%s0 + $0xb8] sm:$0xff]
  %v37 = vld [vmem:[%s0 + $0xc0] sm:$0xff]
  %v38 = vld [vmem:[%s0 + $0xc8] sm:$0xff]
  %v39 = vld [vmem:[%s0 + $0xd0] sm:$0xff]
  %v40 = vld [vmem:[%s0 + $0xd8] sm:$0xff]
  %v41 = vld [vmem:[%s0 + $0xe0] sm:$0xff]
  %v42 = vld [vmem:[%s0 + $0xe8] sm:$0xff]
  %v43 = vld [vmem:[%s0 + $0xf0] sm:$0xff]
  %v44 = vld [vmem:[%s0 + $0xf8] sm:$0xff]
  %v45 = vld [vmem:[%s0 + $0x100] sm:$0xff]
  %v46 = vld [vmem:[%s0 + $0x108] sm:$0xff]
  %v47 = vld [vmem:[%s0 + $0x110] sm:$0xff]
  %v48 = vld [vmem:[%s0 + $0x118] sm:$0xff]
  %v49 = vld [vmem:[%s0 + $0x120] sm:$0xff]
  %v50 = vld [vmem:[%s0 + $0x128] sm:$0xff]
  %v51 = vld [vmem:[%s0 + $0x130] sm:$0xff]
  %v52 = vld [vmem:[%s0 + $0x138] sm:$0xff]
  %v53 = vld [vmem:[%s0 + $0x140] sm:$0xff]
  %v54 = vld [vmem:[%s0 + $0x148] sm:$0xff]
  %v55 = vld [vmem:[%s0 + $0x150] sm:$0xff]
  %v56 = vld [vmem:[%s0 + $0x158] sm:$0xff]
  %v57 = vld [vmem:[%s0 + $0x160] sm:$0xff]
  %v58 = vld [vmem:[%s0 + $0x168] sm:$0xff]
  %v59 = vld [vmem:[%s0 + $0x170] sm:$0xff]
  %v60 = vld [vmem:[%s0 + $0x178] sm:$0xff]
  %v61 = vld [vmem:[%s0 + $0x180] sm:$0xff]
  %v62 = vld [vmem:[%s0 + $0x188] sm:$0xff]
  %v63 = vld [vmem:[%s0 + $0x190] sm:$0xff]
  %v64 = vld [vmem:[%s0 + $0x198] sm:$0xff]
  %v65 = vld [vmem:[%s0 + $0x1a0] sm:$0xff]
  %v66 = vld [vmem:[%s0 + $0x1a8] sm:$0xff]
  %v67 = vld [vmem:[%s0 + $0x1b0] sm:$0xff]
  %v68 = vld [vmem:[%s0 + $0x1b8] sm:$0xff]
  %v69 = vld [vmem:[%s0 + $0x1c0] sm:$0xff]
  %v70 = vld [vmem:[%s0 + $0x1c8] sm:$0xff]
  %v71 = vld [vmem:[%s0 + $0x1d0] sm:$0xff]
  %v72 = vld [vmem:[%s0 + $0x1d8] sm:$0xff]
  %v73 = vld [vmem:[%s0 + $0x1e0] sm:$0xff]
  %v74 = vld [vmem:[%s0 + $0x1e8] sm:$0xff]
  %v75 = vld [vmem:[%s0 + $0x1f0] sm:$0xff]
  %v76 = vld [vmem:[%s0 + $0x1f8] sm:$0xff]
  %v77 = vlaneseq
  %v78 = vshrl.u32 %v77, 7
  %v79 = vsub.s32 0, %v78
  %v80 = vrot.slane %v11, %v79
  %v81 = vmul.f32 %v13, %v80
  %v82 = vmul.f32 %v14, %v80
  %v83 = vmul.f32 %v15, %v80
  %v84 = vmul.f32 %v16, %v80
  %v85 = vmul.f32 %v17, %v80
  %v86 = vmul.f32 %v18, %v80
  %v87 = vmul.f32 %v19, %v80
  %v88 = vmul.f32 %v20, %v80
  %v89 = vmul.f32 %v21, %v80
  %v90 = vmul.f32 %v22, %v80
  %v91 = vmul.f32 %v23, %v80
  %v92 = vmul.f32 %v24, %v80
  %v93 = vmul.f32 %v25, %v80
  %v94 = vmul.f32 %v26, %v80
  %v95 = vmul.f32 %v27, %v80
  %v96 = vmul.f32 %v28, %v80
  %v97 = vmul.f32 %v29, %v80
  %v98 = vmul.f32 %v30, %v80
  %v99 = vmul.f32 %v31, %v80
  %v100 = vmul.f32 %v32, %v80
  %v101 = vmul.f32 %v33, %v80
  %v102 = vmul.f32 %v34, %v80
  %v103 = vmul.f32 %v35, %v80
  %v104 = vmul.f32 %v36, %v80
  %v105 = vmul.f32 %v37, %v80
  %v106 = vmul.f32 %v38, %v80
  %v107 = vmul.f32 %v39, %v80
  %v108 = vmul.f32 %v40, %v80
  %v109 = vmul.f32 %v41, %v80
  %v110 = vmul.f32 %v42, %v80
  %v111 = vmul.f32 %v43, %v80
  %v112 = vmul.f32 %v44, %v80
  %v113 = vmul.f32 %v45, %v80
  %v114 = vmul.f32 %v46, %v80
  %v115 = vmul.f32 %v47, %v80
  %v116 = vmul.f32 %v48, %v80
  %v117 = vmul.f32 %v49, %v80
  %v118 = vmul.f32 %v50, %v80
  %v119 = vmul.f32 %v51, %v80
  %v120 = vmul.f32 %v52, %v80
  %v121 = vmul.f32 %v53, %v80
  %v122 = vmul.f32 %v54, %v80
  %v123 = vmul.f32 %v55, %v80
  %v124 = vmul.f32 %v56, %v80
  %v125 = vmul.f32 %v57, %v80
  %v126 = vmul.f32 %v58, %v80
  %v127 = vmul.f32 %v59, %v80
  %v128 = vmul.f32 %v60, %v80
  %v129 = vmul.f32 %v61, %v80
  %v130 = vmul.f32 %v62, %v80
  %v131 = vmul.f32 %v63, %v80
  %v132 = vmul.f32 %v64, %v80
  %v133 = vmul.f32 %v65, %v80
  %v134 = vmul.f32 %v66, %v80
  %v135 = vmul.f32 %v67, %v80
  %v136 = vmul.f32 %v68, %v80
  %v137 = vmul.f32 %v69, %v80
  %v138 = vmul.f32 %v70, %v80
  %v139 = vmul.f32 %v71, %v80
  %v140 = vmul.f32 %v72, %v80
  %v141 = vmul.f32 %v73, %v80
  %v142 = vmul.f32 %v74, %v80
  %v143 = vmul.f32 %v75, %v80
  %v144 = vmul.f32 %v76, %v80
  %v145 = vlaneseq
  %v146 = vshrl.u32 %v145, 7
  %v147 = vsub.s32 0, %v146
  %v148 = vrot.slane %v12, %v147
  %v149 = vadd.f32 %v81, %v148
  %v150 = vadd.f32 %v82, %v148
  %v151 = vadd.f32 %v83, %v148
  %v152 = vadd.f32 %v84, %v148
  %v153 = vadd.f32 %v85, %v148
  %v154 = vadd.f32 %v86, %v148
  %v155 = vadd.f32 %v87, %v148
  %v156 = vadd.f32 %v88, %v148
  %v157 = vadd.f32 %v89, %v148
  %v158 = vadd.f32 %v90, %v148
  %v159 = vadd.f32 %v91, %v148
  %v160 = vadd.f32 %v92, %v148
  %v161 = vadd.f32 %v93, %v148
  %v162 = vadd.f32 %v94, %v148
  %v163 = vadd.f32 %v95, %v148
  %v164 = vadd.f32 %v96, %v148
  %v165 = vadd.f32 %v97, %v148
  %v166 = vadd.f32 %v98, %v148
  %v167 = vadd.f32 %v99, %v148
  %v168 = vadd.f32 %v100, %v148
  %v169 = vadd.f32 %v101, %v148
  %v170 = vadd.f32 %v102, %v148
  %v171 = vadd.f32 %v103, %v148
  %v172 = vadd.f32 %v104, %v148
  %v173 = vadd.f32 %v105, %v148
  %v174 = vadd.f32 %v106, %v148
  %v175 = vadd.f32 %v107, %v148
  %v176 = vadd.f32 %v108, %v148
  %v177 = vadd.f32 %v109, %v148
  %v178 = vadd.f32 %v110, %v148
  %v179 = vadd.f32 %v111, %v148
  %v180 = vadd.f32 %v112, %v148
  %v181 = vadd.f32 %v113, %v148
  %v182 = vadd.f32 %v114, %v148
  %v183 = vadd.f32 %v115, %v148
  %v184 = vadd.f32 %v116, %v148
  %v185 = vadd.f32 %v117, %v148
  %v186 = vadd.f32 %v118, %v148
  %v187 = vadd.f32 %v119, %v148
  %v188 = vadd.f32 %v120, %v148
  %v189 = vadd.f32 %v121, %v148
  %v190 = vadd.f32 %v122, %v148
  %v191 = vadd.f32 %v123, %v148
  %v192 = vadd.f32 %v124, %v148
  %v193 = vadd.f32 %v125, %v148
  %v194 = vadd.f32 %v126, %v148
  %v195 = vadd.f32 %v127, %v148
  %v196 = vadd.f32 %v128, %v148
  %v197 = vadd.f32 %v129, %v148
  %v198 = vadd.f32 %v130, %v148
  %v199 = vadd.f32 %v131, %v148
  %v200 = vadd.f32 %v132, %v148
  %v201 = vadd.f32 %v133, %v148
  %v202 = vadd.f32 %v134, %v148
  %v203 = vadd.f32 %v135, %v148
  %v204 = vadd.f32 %v136, %v148
  %v205 = vadd.f32 %v137, %v148
  %v206 = vadd.f32 %v138, %v148
  %v207 = vadd.f32 %v139, %v148
  %v208 = vadd.f32 %v140, %v148
  %v209 = vadd.f32 %v141, %v148
  %v210 = vadd.f32 %v142, %v148
  %v211 = vadd.f32 %v143, %v148
  %v212 = vadd.f32 %v144, %v148
  %v213 = vmax.f32 %v149, 0.0
  %v214 = vmax.f32 %v150, 0.0
  %v215 = vmax.f32 %v151, 0.0
  %v216 = vmax.f32 %v152, 0.0
  %v217 = vmax.f32 %v153, 0.0
  %v218 = vmax.f32 %v154, 0.0
  %v219 = vmax.f32 %v155, 0.0
  %v220 = vmax.f32 %v156, 0.0
  %v221 = vmax.f32 %v157, 0.0
  %v222 = vmax.f32 %v158, 0.0
  %v223 = vmax.f32 %v159, 0.0
  %v224 = vmax.f32 %v160, 0.0
  %v225 = vmax.f32 %v161, 0.0
  %v226 = vmax.f32 %v162, 0.0
  %v227 = vmax.f32 %v163, 0.0
  %v228 = vmax.f32 %v164, 0.0
  %v229 = vmax.f32 %v165, 0.0
  %v230 = vmax.f32 %v166, 0.0
  %v231 = vmax.f32 %v167, 0.0
  %v232 = vmax.f32 %v168, 0.0
  %v233 = vmax.f32 %v169, 0.0
  %v234 = vmax.f32 %v170, 0.0
  %v235 = vmax.f32 %v171, 0.0
  %v236 = vmax.f32 %v172, 0.0
  %v237 = vmax.f32 %v173, 0.0
  %v238 = vmax.f32 %v174, 0.0
  %v239 = vmax.f32 %v175, 0.0
  %v240 = vmax.f32 %v176, 0.0
  %v241 = vmax.f32 %v177, 0.0
  %v242 = vmax.f32 %v178, 0.0
  %v243 = vmax.f32 %v179, 0.0
  %v244 = vmax.f32 %v180, 0.0
  %v245 = vmax.f32 %v181, 0.0
  %v246 = vmax.f32 %v182, 0.0
  %v247 = vmax.f32 %v183, 0.0
  %v248 = vmax.f32 %v184, 0.0
  %v249 = vmax.f32 %v185, 0.0
  %v250 = vmax.f32 %v186, 0.0
  %v251 = vmax.f32 %v187, 0.0
  %v252 = vmax.f32 %v188, 0.0
  %v253 = vmax.f32 %v189, 0.0
  %v254 = vmax.f32 %v190, 0.0
  %v255 = vmax.f32 %v191, 0.0
  %v256 = vmax.f32 %v192, 0.0
  %v257 = vmax.f32 %v193, 0.0
  %v258 = vmax.f32 %v194, 0.0
  %v259 = vmax.f32 %v195, 0.0
  %v260 = vmax.f32 %v196, 0.0
  %v261 = vmax.f32 %v197, 0.0
  %v262 = vmax.f32 %v198, 0.0
  %v263 = vmax.f32 %v199, 0.0
  %v264 = vmax.f32 %v200, 0.0
  %v265 = vmax.f32 %v201, 0.0
  %v266 = vmax.f32 %v202, 0.0
  %v267 = vmax.f32 %v203, 0.0
  %v268 = vmax.f32 %v204, 0.0
  %v269 = vmax.f32 %v205, 0.0
  %v270 = vmax.f32 %v206, 0.0
  %v271 = vmax.f32 %v207, 0.0
  %v272 = vmax.f32 %v208, 0.0
  %v273 = vmax.f32 %v209, 0.0
  %v274 = vmax.f32 %v210, 0.0
  %v275 = vmax.f32 %v211, 0.0
  %v276 = vmax.f32 %v212, 0.0
  %277 = vst [vmem:[%s2] sm:$0xff] %v213
  %278 = vst [vmem:[%s2 + $0x8] sm:$0xff] %v214
  %279 = vst [vmem:[%s2 + $0x10] sm:$0xff] %v215
  %280 = vst [vmem:[%s2 + $0x18] sm:$0xff] %v216
  %281 = vst [vmem:[%s2 + $0x20] sm:$0xff] %v217
  %282 = vst [vmem:[%s2 + $0x28] sm:$0xff] %v218
  %283 = vst [vmem:[%s2 + $0x30] sm:$0xff] %v219
  %284 = vst [vmem:[%s2 + $0x38] sm:$0xff] %v220
  %285 = vst [vmem:[%s2 + $0x40] sm:$0xff] %v221
  %286 = vst [vmem:[%s2 + $0x48] sm:$0xff] %v222
  %287 = vst [vmem:[%s2 + $0x50] sm:$0xff] %v223
  %288 = vst [vmem:[%s2 + $0x58] sm:$0xff] %v224
  %289 = vst [vmem:[%s2 + $0x60] sm:$0xff] %v225
  %290 = vst [vmem:[%s2 + $0x68] sm:$0xff] %v226
  %291 = vst [vmem:[%s2 + $0x70] sm:$0xff] %v227
  %292 = vst [vmem:[%s2 + $0x78] sm:$0xff] %v228
  %293 = vst [vmem:[%s2 + $0x80] sm:$0xff] %v229
  %294 = vst [vmem:[%s2 + $0x88] sm:$0xff] %v230
  %295 = vst [vmem:[%s2 + $0x90] sm:$0xff] %v231
  %296 = vst [vmem:[%s2 + $0x98] sm:$0xff] %v232
  %297 = vst [vmem:[%s2 + $0xa0] sm:$0xff] %v233
  %298 = vst [vmem:[%s2 + $0xa8] sm:$0xff] %v234
  %299 = vst [vmem:[%s2 + $0xb0] sm:$0xff] %v235
  %300 = vst [vmem:[%s2 + $0xb8] sm:$0xff] %v236
  %301 = vst [vmem:[%s2 + $0xc0] sm:$0xff] %v237
  %302 = vst [vmem:[%s2 + $0xc8] sm:$0xff] %v238
  %303 = vst [vmem:[%s2 + $0xd0] sm:$0xff] %v239
  %304 = vst [vmem:[%s2 + $0xd8] sm:$0xff] %v240
  %305 = vst [vmem:[%s2 + $0xe0] sm:$0xff] %v241
  %306 = vst [vmem:[%s2 + $0xe8] sm:$0xff] %v242
  %307 = vst [vmem:[%s2 + $0xf0] sm:$0xff] %v243
  %308 = vst [vmem:[%s2 + $0xf8] sm:$0xff] %v244
  %309 = vst [vmem:[%s2 + $0x100] sm:$0xff] %v245
  %310 = vst [vmem:[%s2 + $0x108] sm:$0xff] %v246
  %311 = vst [vmem:[%s2 + $0x110] sm:$0xff] %v247
  %312 = vst [vmem:[%s2 + $0x118] sm:$0xff] %v248
  %313 = vst [vmem:[%s2 + $0x120] sm:$0xff] %v249
  %314 = vst [vmem:[%s2 + $0x128] sm:$0xff] %v250
  %315 = vst [vmem:[%s2 + $0x130] sm:$0xff] %v251
  %316 = vst [vmem:[%s2 + $0x138] sm:$0xff] %v252
  %317 = vst [vmem:[%s2 + $0x140] sm:$0xff] %v253
  %318 = vst [vmem:[%s2 + $0x148] sm:$0xff] %v254
  %319 = vst [vmem:[%s2 + $0x150] sm:$0xff] %v255
  %320 = vst [vmem:[%s2 + $0x158] sm:$0xff] %v256
  %321 = vst [vmem:[%s2 + $0x160] sm:$0xff] %v257
  %322 = vst [vmem:[%s2 + $0x168] sm:$0xff] %v258
  %323 = vst [vmem:[%s2 + $0x170] sm:$0xff] %v259
  %324 = vst [vmem:[%s2 + $0x178] sm:$0xff] %v260
  %325 = vst [vmem:[%s2 + $0x180] sm:$0xff] %v261
  %326 = vst [vmem:[%s2 + $0x188] sm:$0xff] %v262
  %327 = vst [vmem:[%s2 + $0x190] sm:$0xff] %v263
  %328 = vst [vmem:[%s2 + $0x198] sm:$0xff] %v264
  %329 = vst [vmem:[%s2 + $0x1a0] sm:$0xff] %v265
  %330 = vst [vmem:[%s2 + $0x1a8] sm:$0xff] %v266
  %331 = vst [vmem:[%s2 + $0x1b0] sm:$0xff] %v267
  %332 = vst [vmem:[%s2 + $0x1b8] sm:$0xff] %v268
  %333 = vst [vmem:[%s2 + $0x1c0] sm:$0xff] %v269
  %334 = vst [vmem:[%s2 + $0x1c8] sm:$0xff] %v270
  %335 = vst [vmem:[%s2 + $0x1d0] sm:$0xff] %v271
  %336 = vst [vmem:[%s2 + $0x1d8] sm:$0xff] %v272
  %337 = vst [vmem:[%s2 + $0x1e0] sm:$0xff] %v273
  %338 = vst [vmem:[%s2 + $0x1e8] sm:$0xff] %v274
  %339 = vst [vmem:[%s2 + $0x1f0] sm:$0xff] %v275
  %340 = vst [vmem:[%s2 + $0x1f8] sm:$0xff] %v276
  // Predicated region
  $region10: #{_conv_bn_relu.3} parent=0 // pred_check
    _
  $region11: #{_conv_bn_relu.3} parent=0 // pred_check_branch
    %342 = sbr.rel (0) target = $region13
  $region12: #{_conv_bn_relu.3} parent=0 // pred_region
    _
  $region13: #{_conv_bn_relu.3} parent=0 // pred_fallthru
    _
  // Predicated region
  $region14: #{_conv_bn_relu.3} parent=0 // pred_check
    _
  $region15: #{_conv_bn_relu.3} parent=0 // pred_check_branch
    %344 = sbr.rel (0) target = $region17
  $region16: #{_conv_bn_relu.3} parent=0 // pred_region
    _
  $region17: #{_conv_bn_relu.3} parent=0 // pred_fallthru
    _

// kernel: _conv_bn_relu.2
$region0: #{_conv_bn_relu.2}
  #allocation0 [shape = 'u32[]', space=smem, size = 0x4, offset = 0x4, fixed_abs, tag = 'smem constant byte address 0x4 - core index']
  #allocation1 [shape = 'u32[144,128]{1,0:T(1,128)}', space=vmem, size = 0x12000, scoped, tag = 'internal scratch']
  %s0 = inlined_call_operand.vmem [shape: bf16[512,36], index: 0, kind: input, shape index: {}]
  %s1 = inlined_call_operand.vmem [shape: bf16[36,128], index: 1, kind: input, shape index: {}]
  %s2 = inlined_call_operand.vmem [shape: f32[1,128], index: 2, kind: input, shape index: {}]
  %s3 = inlined_call_operand.vmem [shape: f32[512,128], index: 3, kind: output, shape index: {0}]
  %s4 = inlined_call_operand.vmem [shape: f32[1,2,128], index: 4, kind: output, shape index: {1}]
  %5 = xla_tuple %s3, %s4
  %s6 = sld [smem:[#allocation0]]
  $region30: #{_conv_bn_relu.2} parent=0
    _
  %s8 = ssub.s32 1, %s6
  %s9 = scalar_select 0, %s8, %s6
  // Predicated region
  $region2: #{_conv_bn_relu.2} parent=0 // pred_check
    _
  $region3: #{_conv_bn_relu.2} parent=0 // pred_check_branch
    %11 = sbr.rel (0) target = $region5
  $region4: #{_conv_bn_relu.2} parent=0 // pred_region
    _
  $region5: #{_conv_bn_relu.2} parent=0 // pred_fallthru
    _
  // Predicated region
  $region6: #{_conv_bn_relu.2} parent=0 // pred_check
    _
  $region7: #{_conv_bn_relu.2} parent=0 // pred_check_branch
    %13 = sbr.rel (0) target = $region9
  $region8: #{_conv_bn_relu.2} parent=0 // pred_region
    _
  $region9: #{_conv_bn_relu.2} parent=0 // pred_fallthru
    _
  // Predicated region
  $region10: #{_conv_bn_relu.2} parent=0 // pred_check
    _
  $region11: #{_conv_bn_relu.2} parent=0 // pred_check_branch
    %15 = sbr.rel (0) target = $region13
  $region12: #{_conv_bn_relu.2} parent=0 // pred_region
    _
  $region13: #{_conv_bn_relu.2} parent=0 // pred_fallthru
    _
  %v17 = vld [vmem:[%s0] sm:$0xf]
  %v18 = vld [vmem:[%s0 + $0x4] sm:$0xf]
  %v19 = vld [vmem:[%s0 + $0x8] sm:$0xf]
  %v20 = vld [vmem:[%s0 + $0xc] sm:$0xf]
  %v21 = vld [vmem:[%s0 + $0x10] sm:$0xf]
  %v22 = vld [vmem:[%s0 + $0x14] sm:$0xf]
  %v23 = vld [vmem:[%s0 + $0x18] sm:$0xf]
  %v24 = vld [vmem:[%s0 + $0x1c] sm:$0xf]
  %v25 = vld [vmem:[%s0 + $0x20] sm:$0xf]
  %v26 = vld [vmem:[%s0 + $0x24] sm:$0xf]
  %v27 = vld [vmem:[%s0 + $0x28] sm:$0xf]
  %v28 = vld [vmem:[%s0 + $0x2c] sm:$0xf]
  %v29 = vld [vmem:[%s0 + $0x30] sm:$0xf]
  %v30 = vld [vmem:[%s0 + $0x34] sm:$0xf]
  %v31 = vld [vmem:[%s0 + $0x38] sm:$0xf]
  %v32 = vld [vmem:[%s0 + $0x3c] sm:$0xf]
  %v33 = vld [vmem:[%s0 + $0x40] sm:$0xf]
  %v34 = vld [vmem:[%s0 + $0x44] sm:$0xf]
  %v35 = vld [vmem:[%s0 + $0x48] sm:$0xf]
  %v36 = vld [vmem:[%s0 + $0x4c] sm:$0xf]
  %v37 = vld [vmem:[%s0 + $0x50] sm:$0xf]
  %v38 = vld [vmem:[%s0 + $0x54] sm:$0xf]
  %v39 = vld [vmem:[%s0 + $0x58] sm:$0xf]
  %v40 = vld [vmem:[%s0 + $0x5c] sm:$0xf]
  %v41 = vld [vmem:[%s0 + $0x60] sm:$0xf]
  %v42 = vld [vmem:[%s0 + $0x64] sm:$0xf]
  %v43 = vld [vmem:[%s0 + $0x68] sm:$0xf]
  %v44 = vld [vmem:[%s0 + $0x6c] sm:$0xf]
  %v45 = vld [vmem:[%s0 + $0x70] sm:$0xf]
  %v46 = vld [vmem:[%s0 + $0x74] sm:$0xf]
  %v47 = vld [vmem:[%s0 + $0x78] sm:$0xf]
  %v48 = vld [vmem:[%s0 + $0x7c] sm:$0xf]
  %v49 = vld [vmem:[%s0 + $0x80] sm:$0xf]
  %v50 = vld [vmem:[%s0 + $0x84] sm:$0xf]
  %v51 = vld [vmem:[%s0 + $0x88] sm:$0xf]
  %v52 = vld [vmem:[%s0 + $0x8c] sm:$0xf]
  %v53 = vld [vmem:[%s0 + $0x90] sm:$0xf]
  %v54 = vld [vmem:[%s0 + $0x94] sm:$0xf]
  %v55 = vld [vmem:[%s0 + $0x98] sm:$0xf]
  %v56 = vld [vmem:[%s0 + $0x9c] sm:$0xf]
  %v57 = vld [vmem:[%s0 + $0xa0] sm:$0xf]
  %v58 = vld [vmem:[%s0 + $0xa4] sm:$0xf]
  %v59 = vld [vmem:[%s0 + $0xa8] sm:$0xf]
  %v60 = vld [vmem:[%s0 + $0xac] sm:$0xf]
  %v61 = vld [vmem:[%s0 + $0xb0] sm:$0xf]
  %v62 = vld [vmem:[%s0 + $0xb4] sm:$0xf]
  %v63 = vld [vmem:[%s0 + $0xb8] sm:$0xf]
  %v64 = vld [vmem:[%s0 + $0xbc] sm:$0xf]
  %v65 = vld [vmem:[%s0 + $0xc0] sm:$0xf]
  %v66 = vld [vmem:[%s0 + $0xc4] sm:$0xf]
  %v67 = vld [vmem:[%s0 + $0xc8] sm:$0xf]
  %v68 = vld [vmem:[%s0 + $0xcc] sm:$0xf]
  %v69 = vld [vmem:[%s0 + $0xd0] sm:$0xf]
  %v70 = vld [vmem:[%s0 + $0xd4] sm:$0xf]
  %v71 = vld [vmem:[%s0 + $0xd8] sm:$0xf]
  %v72 = vld [vmem:[%s0 + $0xdc] sm:$0xf]
  %v73 = vld [vmem:[%s0 + $0xe0] sm:$0xf]
  %v74 = vld [vmem:[%s0 + $0xe4] sm:$0xf]
  %v75 = vld [vmem:[%s0 + $0xe8] sm:$0xf]
  %v76 = vld [vmem:[%s0 + $0xec] sm:$0xf]
  %v77 = vld [vmem:[%s0 + $0xf0] sm:$0xf]
  %v78 = vld [vmem:[%s0 + $0xf4] sm:$0xf]
  %v79 = vld [vmem:[%s0 + $0xf8] sm:$0xf]
  %v80 = vld [vmem:[%s0 + $0xfc] sm:$0xf]
  %v81 = vld [vmem:[%s1] sm:$0xf]
  %v82 = vld [vmem:[%s1 + $0x4] sm:$0xf]
  %v83 = vld [vmem:[%s1 + $0x8] sm:$0xf]
  %v84 = vld [vmem:[%s1 + $0xc] sm:$0xf]
  %v85 = vld [vmem:[%s1 + $0x10] sm:$0x3]
  %v150 = vunpack.c.l.b16 %v17
  %v151 = vunpack.c.l.b16 %v18
  %v152 = vunpack.c.l.b16 %v19
  %v153 = vunpack.c.l.b16 %v20
  %v154 = vunpack.c.l.b16 %v21
  %v155 = vunpack.c.l.b16 %v22
  %v156 = vunpack.c.l.b16 %v23
  %v157 = vunpack.c.l.b16 %v24
  %v158 = vunpack.c.l.b16 %v25
  %v159 = vunpack.c.l.b16 %v26
  %v160 = vunpack.c.l.b16 %v27
  %v161 = vunpack.c.l.b16 %v28
  %v162 = vunpack.c.l.b16 %v29
  %v163 = vunpack.c.l.b16 %v30
  %v164 = vunpack.c.l.b16 %v31
  %v165 = vunpack.c.l.b16 %v32
  %v166 = vunpack.c.l.b16 %v33
  %v167 = vunpack.c.l.b16 %v34
  %v168 = vunpack.c.l.b16 %v35
  %v169 = vunpack.c.l.b16 %v36
  %v170 = vunpack.c.l.b16 %v37
  %v171 = vunpack.c.l.b16 %v38
  %v172 = vunpack.c.l.b16 %v39
  %v173 = vunpack.c.l.b16 %v40
  %v174 = vunpack.c.l.b16 %v41
  %v175 = vunpack.c.l.b16 %v42
  %v176 = vunpack.c.l.b16 %v43
  %v177 = vunpack.c.l.b16 %v44
  %v178 = vunpack.c.l.b16 %v45
  %v179 = vunpack.c.l.b16 %v46
  %v180 = vunpack.c.l.b16 %v47
  %v181 = vunpack.c.l.b16 %v48
  %v182 = vunpack.c.l.b16 %v49
  %v183 = vunpack.c.l.b16 %v50
  %v184 = vunpack.c.l.b16 %v51
  %v185 = vunpack.c.l.b16 %v52
  %v186 = vunpack.c.l.b16 %v53
  %v187 = vunpack.c.l.b16 %v54
  %v188 = vunpack.c.l.b16 %v55
  %v189 = vunpack.c.l.b16 %v56
  %v190 = vunpack.c.l.b16 %v57
  %v191 = vunpack.c.l.b16 %v58
  %v192 = vunpack.c.l.b16 %v59
  %v193 = vunpack.c.l.b16 %v60
  %v194 = vunpack.c.l.b16 %v61
  %v195 = vunpack.c.l.b16 %v62
  %v196 = vunpack.c.l.b16 %v63
  %v197 = vunpack.c.l.b16 %v64
  %v198 = vunpack.c.l.b16 %v65
  %v199 = vunpack.c.l.b16 %v66
  %v200 = vunpack.c.l.b16 %v67
  %v201 = vunpack.c.l.b16 %v68
  %v202 = vunpack.c.l.b16 %v69
  %v203 = vunpack.c.l.b16 %v70
  %v204 = vunpack.c.l.b16 %v71
  %v205 = vunpack.c.l.b16 %v72
  %v206 = vunpack.c.l.b16 %v73
  %v207 = vunpack.c.l.b16 %v74
  %v208 = vunpack.c.l.b16 %v75
  %v209 = vunpack.c.l.b16 %v76
  %v210 = vunpack.c.l.b16 %v77
  %v211 = vunpack.c.l.b16 %v78
  %v212 = vunpack.c.l.b16 %v79
  %v213 = vunpack.c.l.b16 %v80
  %v214 = vpack.c.b16 %v151, %v150
  %v215 = vpack.c.b16 %v153, %v152
  %v216 = vpack.c.b16 %v155, %v154
  %v217 = vpack.c.b16 %v157, %v156
  %v218 = vpack.c.b16 %v159, %v158
  %v219 = vpack.c.b16 %v161, %v160
  %v220 = vpack.c.b16 %v163, %v162
  %v221 = vpack.c.b16 %v165, %v164
  %v222 = vpack.c.b16 %v167, %v166
  %v223 = vpack.c.b16 %v169, %v168
  %v224 = vpack.c.b16 %v171, %v170
  %v225 = vpack.c.b16 %v173, %v172
  %v226 = vpack.c.b16 %v175, %v174
  %v227 = vpack.c.b16 %v177, %v176
  %v228 = vpack.c.b16 %v179, %v178
  %v229 = vpack.c.b16 %v181, %v180
  %v230 = vpack.c.b16 %v183, %v182
  %v231 = vpack.c.b16 %v185, %v184
  %v232 = vpack.c.b16 %v187, %v186
  %v233 = vpack.c.b16 %v189, %v188
  %v234 = vpack.c.b16 %v191, %v190
  %v235 = vpack.c.b16 %v193, %v192
  %v236 = vpack.c.b16 %v195, %v194
  %v237 = vpack.c.b16 %v197, %v196
  %v238 = vpack.c.b16 %v199, %v198
  %v239 = vpack.c.b16 %v201, %v200
  %v240 = vpack.c.b16 %v203, %v202
  %v241 = vpack.c.b16 %v205, %v204
  %v242 = vpack.c.b16 %v207, %v206
  %v243 = vpack.c.b16 %v209, %v208
  %v244 = vpack.c.b16 %v211, %v210
  %v245 = vpack.c.b16 %v213, %v212
  %v251 = vunpack.c.l.b16 %v81
  %v252 = vunpack.c.l.b16 %v82
  %v253 = vunpack.c.l.b16 %v83
  %v254 = vunpack.c.l.b16 %v84
  %v255 = vunpack.c.l.b16 %v85
  %v256 = vpack.c.b16 %v252, %v251
  %v257 = vpack.c.b16 %v254, %v253
  %v258 = vpack.c.b16 %v255, %v255
  %vm261 = vcmask 293888
  %v263 = vsel %vm261, %v214, 0
  %v266 = vsel %vm261, %v215, 0
  %v269 = vsel %vm261, %v216, 0
  %v272 = vsel %vm261, %v217, 0
  %v275 = vsel %vm261, %v218, 0
  %v278 = vsel %vm261, %v219, 0
  %v281 = vsel %vm261, %v220, 0
  %v284 = vsel %vm261, %v221, 0
  %v287 = vsel %vm261, %v222, 0
  %v290 = vsel %vm261, %v223, 0
  %v293 = vsel %vm261, %v224, 0
  %v296 = vsel %vm261, %v225, 0
  %v299 = vsel %vm261, %v226, 0
  %v302 = vsel %vm261, %v227, 0
  %v305 = vsel %vm261, %v228, 0
  %v308 = vsel %vm261, %v229, 0
  %v311 = vsel %vm261, %v230, 0
  %v314 = vsel %vm261, %v231, 0
  %v317 = vsel %vm261, %v232, 0
  %v320 = vsel %vm261, %v233, 0
  %v323 = vsel %vm261, %v234, 0
  %v326 = vsel %vm261, %v235, 0
  %v329 = vsel %vm261, %v236, 0
  %v332 = vsel %vm261, %v237, 0
  %v335 = vsel %vm261, %v238, 0
  %v338 = vsel %vm261, %v239, 0
  %v341 = vsel %vm261, %v240, 0
  %v344 = vsel %vm261, %v241, 0
  %v347 = vsel %vm261, %v242, 0
  %v350 = vsel %vm261, %v243, 0
  %v353 = vsel %vm261, %v244, 0
  %v356 = vsel %vm261, %v245, 0
  %vm358 = vcmask 1041408
  %v360 = vsel %vm358, %v258, 0
  %362 = vmatprep.subr.bf16.mxu0 0
  %363 = vmatpush1.bf16.msra.mxu0 0
  %364 = vmatprep.subr.bf16.mxu0 0
  %365 = vmatpush1.bf16.msra.mxu0 0
  %366 = vmatprep.subr.bf16.mxu0 0
  %367 = vmatpush1.bf16.msra.mxu0 0
  %368 = vmatprep.subr.bf16.mxu0 0
  %369 = vmatpush1.bf16.msra.mxu0 0
  %370 = vmatprep.subr.bf16.mxu0 0
  %371 = vmatpush1.bf16.msra.mxu0 0
  %372 = vmatprep.subr.bf16.mxu0 0
  %373 = vmatpush1.bf16.msra.mxu0 %v360
  %374 = vmatprep.subr.bf16.mxu0 0
  %375 = vmatpush1.bf16.msra.mxu0 %v257
  %376 = vmatprep.subr.bf16.mxu0 0
  %377 = vmatpush1.bf16.msra.mxu0 %v256
  %378 = vmatprep.subr.bf16.mxu0 0
  %379 = vmatpush2.bf16.msra.mxu0 0
  %380 = vmatprep.subr.bf16.mxu0 0
  %381 = vmatpush2.bf16.msra.mxu0 0
  %382 = vmatprep.subr.bf16.mxu0 0
  %383 = vmatpush2.bf16.msra.mxu0 0
  %384 = vmatprep.subr.bf16.mxu0 0
  %385 = vmatpush2.bf16.msra.mxu0 0
  %386 = vmatprep.subr.bf16.mxu0 0
  %387 = vmatpush2.bf16.msra.mxu0 0
  %388 = vmatprep.subr.bf16.mxu0 0
  %389 = vmatpush2.bf16.msra.mxu0 0
  %390 = vmatprep.subr.bf16.mxu0 0
  %391 = vmatpush2.bf16.msra.mxu0 0
  %392 = vmatprep.subr.bf16.mxu0 0
  %393 = vmatpush2.bf16.msra.mxu0 0
  %394 = vmatprep.mubr.bf16.mxu0 0
  %395 = vmatmul.mubr.bf16.gmra.mxu0 %v263
  %v396 = vpop.f32.mrf.mxu0
  %v397 = vadd.f32 0.0, %v396
  %v398 = vpop.f32.mrf.mxu0
  %v399 = vpop.f32.mrf.mxu0
  %v400 = vadd.f32 0.0, %v399
  %v401 = vpop.f32.mrf.mxu0
  %402 = vmatprep.mubr.bf16.mxu0 0
  %403 = vmatmul.mubr.bf16.gmra.mxu0 %v266
  %v404 = vpop.f32.mrf.mxu0
  %v405 = vadd.f32 0.0, %v404
  %v406 = vpop.f32.mrf.mxu0
  %v407 = vpop.f32.mrf.mxu0
  %v408 = vadd.f32 0.0, %v407
  %v409 = vpop.f32.mrf.mxu0
  %410 = vmatprep.mubr.bf16.mxu0 0
  %411 = vmatmul.mubr.bf16.gmra.mxu0 %v269
  %v412 = vpop.f32.mrf.mxu0
  %v413 = vadd.f32 0.0, %v412
  %v414 = vpop.f32.mrf.mxu0
  %v415 = vpop.f32.mrf.mxu0
  %v416 = vadd.f32 0.0, %v415
  %v417 = vpop.f32.mrf.mxu0
  %418 = vmatprep.mubr.bf16.mxu0 0
  %419 = vmatmul.mubr.bf16.gmra.mxu0 %v272
  %v420 = vpop.f32.mrf.mxu0
  %v421 = vadd.f32 0.0, %v420
  %v422 = vpop.f32.mrf.mxu0
  %v423 = vpop.f32.mrf.mxu0
  %v424 = vadd.f32 0.0, %v423
  %v425 = vpop.f32.mrf.mxu0
  %426 = vmatprep.mubr.bf16.mxu0 0
  %427 = vmatmul.mubr.bf16.gmra.mxu0 %v275
  %v428 = vpop.f32.mrf.mxu0
  %v429 = vadd.f32 0.0, %v428
  %v430 = vpop.f32.mrf.mxu0
  %v431 = vpop.f32.mrf.mxu0
  %v432 = vadd.f32 0.0, %v431
  %v433 = vpop.f32.mrf.mxu0
  %434 = vmatprep.mubr.bf16.mxu0 0
  %435 = vmatmul.mubr.bf16.gmra.mxu0 %v278
  %v436 = vpop.f32.mrf.mxu0
  %v437 = vadd.f32 0.0, %v436
  %v438 = vpop.f32.mrf.mxu0
  %v439 = vpop.f32.mrf.mxu0
  %v440 = vadd.f32 0.0, %v439
  %v441 = vpop.f32.mrf.mxu0
  %442 = vmatprep.mubr.bf16.mxu0 0
  %443 = vmatmul.mubr.bf16.gmra.mxu0 %v281
  %v444 = vpop.f32.mrf.mxu0
  %v445 = vadd.f32 0.0, %v444
  %v446 = vpop.f32.mrf.mxu0
  %v447 = vpop.f32.mrf.mxu0
  %v448 = vadd.f32 0.0, %v447
  %v449 = vpop.f32.mrf.mxu0
  %450 = vmatprep.mubr.bf16.mxu0 0
  %451 = vmatmul.mubr.bf16.gmra.mxu0 %v284
  %v452 = vpop.f32.mrf.mxu0
  %v453 = vadd.f32 0.0, %v452
  %v454 = vpop.f32.mrf.mxu0
  %v455 = vpop.f32.mrf.mxu0
  %v456 = vadd.f32 0.0, %v455
  %v457 = vpop.f32.mrf.mxu0
  %458 = vmatprep.mubr.bf16.mxu0 0
  %459 = vmatmul.mubr.bf16.gmra.mxu0 %v287
  %v460 = vpop.f32.mrf.mxu0
  %v461 = vadd.f32 0.0, %v460
  %v462 = vpop.f32.mrf.mxu0
  %v463 = vpop.f32.mrf.mxu0
  %v464 = vadd.f32 0.0, %v463
  %v465 = vpop.f32.mrf.mxu0
  %466 = vmatprep.mubr.bf16.mxu0 0
  %467 = vmatmul.mubr.bf16.gmra.mxu0 %v290
  %v468 = vpop.f32.mrf.mxu0
  %v469 = vadd.f32 0.0, %v468
  %v470 = vpop.f32.mrf.mxu0
  %v471 = vpop.f32.mrf.mxu0
  %v472 = vadd.f32 0.0, %v471
  %v473 = vpop.f32.mrf.mxu0
  %474 = vmatprep.mubr.bf16.mxu0 0
  %475 = vmatmul.mubr.bf16.gmra.mxu0 %v293
  %v476 = vpop.f32.mrf.mxu0
  %v477 = vadd.f32 0.0, %v476
  %v478 = vpop.f32.mrf.mxu0
  %v479 = vpop.f32.mrf.mxu0
  %v480 = vadd.f32 0.0, %v479
  %v481 = vpop.f32.mrf.mxu0
  %482 = vmatprep.mubr.bf16.mxu0 0
  %483 = vmatmul.mubr.bf16.gmra.mxu0 %v296
  %v484 = vpop.f32.mrf.mxu0
  %v485 = vadd.f32 0.0, %v484
  %v486 = vpop.f32.mrf.mxu0
  %v487 = vpop.f32.mrf.mxu0
  %v488 = vadd.f32 0.0, %v487
  %v489 = vpop.f32.mrf.mxu0
  %490 = vmatprep.mubr.bf16.mxu0 0
  %491 = vmatmul.mubr.bf16.gmra.mxu0 %v299
  %v492 = vpop.f32.mrf.mxu0
  %v493 = vadd.f32 0.0, %v492
  %v494 = vpop.f32.mrf.mxu0
  %v495 = vpop.f32.mrf.mxu0
  %v496 = vadd.f32 0.0, %v495
  %v497 = vpop.f32.mrf.mxu0
  %498 = vmatprep.mubr.bf16.mxu0 0
  %499 = vmatmul.mubr.bf16.gmra.mxu0 %v302
  %v500 = vpop.f32.mrf.mxu0
  %v501 = vadd.f32 0.0, %v500
  %v502 = vpop.f32.mrf.mxu0
  %v503 = vpop.f32.mrf.mxu0
  %v504 = vadd.f32 0.0, %v503
  %v505 = vpop.f32.mrf.mxu0
  %506 = vmatprep.mubr.bf16.mxu0 0
  %507 = vmatmul.mubr.bf16.gmra.mxu0 %v305
  %v508 = vpop.f32.mrf.mxu0
  %v509 = vadd.f32 0.0, %v508
  %v510 = vpop.f32.mrf.mxu0
  %v511 = vpop.f32.mrf.mxu0
  %v512 = vadd.f32 0.0, %v511
  %v513 = vpop.f32.mrf.mxu0
  %514 = vmatprep.mubr.bf16.mxu0 0
  %515 = vmatmul.mubr.bf16.gmra.mxu0 %v308
  %v516 = vpop.f32.mrf.mxu0
  %v517 = vadd.f32 0.0, %v516
  %v518 = vpop.f32.mrf.mxu0
  %v519 = vpop.f32.mrf.mxu0
  %v520 = vadd.f32 0.0, %v519
  %v521 = vpop.f32.mrf.mxu0
  %522 = vmatprep.mubr.bf16.mxu0 0
  %523 = vmatmul.mubr.bf16.gmra.mxu0 %v311
  %v524 = vpop.f32.mrf.mxu0
  %v525 = vadd.f32 0.0, %v524
  %v526 = vpop.f32.mrf.mxu0
  %v527 = vpop.f32.mrf.mxu0
  %v528 = vadd.f32 0.0, %v527
  %v529 = vpop.f32.mrf.mxu0
  %530 = vmatprep.mubr.bf16.mxu0 0
  %531 = vmatmul.mubr.bf16.gmra.mxu0 %v314
  %v532 = vpop.f32.mrf.mxu0
  %v533 = vadd.f32 0.0, %v532
  %v534 = vpop.f32.mrf.mxu0
  %v535 = vpop.f32.mrf.mxu0
  %v536 = vadd.f32 0.0, %v535
  %v537 = vpop.f32.mrf.mxu0
  %538 = vmatprep.mubr.bf16.mxu0 0
  %539 = vmatmul.mubr.bf16.gmra.mxu0 %v317
  %v540 = vpop.f32.mrf.mxu0
  %v541 = vadd.f32 0.0, %v540
  %v542 = vpop.f32.mrf.mxu0
  %v543 = vpop.f32.mrf.mxu0
  %v544 = vadd.f32 0.0, %v543
  %v545 = vpop.f32.mrf.mxu0
  %546 = vmatprep.mubr.bf16.mxu0 0
  %547 = vmatmul.mubr.bf16.gmra.mxu0 %v320
  %v548 = vpop.f32.mrf.mxu0
  %v549 = vadd.f32 0.0, %v548
  %v550 = vpop.f32.mrf.mxu0
  %v551 = vpop.f32.mrf.mxu0
  %v552 = vadd.f32 0.0, %v551
  %v553 = vpop.f32.mrf.mxu0
  %554 = vmatprep.mubr.bf16.mxu0 0
  %555 = vmatmul.mubr.bf16.gmra.mxu0 %v323
  %v556 = vpop.f32.mrf.mxu0
  %v557 = vadd.f32 0.0, %v556
  %v558 = vpop.f32.mrf.mxu0
  %v559 = vpop.f32.mrf.mxu0
  %v560 = vadd.f32 0.0, %v559
  %v561 = vpop.f32.mrf.mxu0
  %562 = vmatprep.mubr.bf16.mxu0 0
  %563 = vmatmul.mubr.bf16.gmra.mxu0 %v326
  %v564 = vpop.f32.mrf.mxu0
  %v565 = vadd.f32 0.0, %v564
  %v566 = vpop.f32.mrf.mxu0
  %v567 = vpop.f32.mrf.mxu0
  %v568 = vadd.f32 0.0, %v567
  %v569 = vpop.f32.mrf.mxu0
  %570 = vmatprep.mubr.bf16.mxu0 0
  %571 = vmatmul.mubr.bf16.gmra.mxu0 %v329
  %v572 = vpop.f32.mrf.mxu0
  %v573 = vadd.f32 0.0, %v572
  %v574 = vpop.f32.mrf.mxu0
  %v575 = vpop.f32.mrf.mxu0
  %v576 = vadd.f32 0.0, %v575
  %v577 = vpop.f32.mrf.mxu0
  %578 = vmatprep.mubr.bf16.mxu0 0
  %579 = vmatmul.mubr.bf16.gmra.mxu0 %v332
  %v580 = vpop.f32.mrf.mxu0
  %v581 = vadd.f32 0.0, %v580
  %v582 = vpop.f32.mrf.mxu0
  %v583 = vpop.f32.mrf.mxu0
  %v584 = vadd.f32 0.0, %v583
  %v585 = vpop.f32.mrf.mxu0
  %586 = vmatprep.mubr.bf16.mxu0 0
  %587 = vmatmul.mubr.bf16.gmra.mxu0 %v335
  %v588 = vpop.f32.mrf.mxu0
  %v589 = vadd.f32 0.0, %v588
  %v590 = vpop.f32.mrf.mxu0
  %v591 = vpop.f32.mrf.mxu0
  %v592 = vadd.f32 0.0, %v591
  %v593 = vpop.f32.mrf.mxu0
  %594 = vmatprep.mubr.bf16.mxu0 0
  %595 = vmatmul.mubr.bf16.gmra.mxu0 %v338
  %v596 = vpop.f32.mrf.mxu0
  %v597 = vadd.f32 0.0, %v596
  %v598 = vpop.f32.mrf.mxu0
  %v599 = vpop.f32.mrf.mxu0
  %v600 = vadd.f32 0.0, %v599
  %v601 = vpop.f32.mrf.mxu0
  %602 = vmatprep.mubr.bf16.mxu0 0
  %603 = vmatmul.mubr.bf16.gmra.mxu0 %v341
  %v604 = vpop.f32.mrf.mxu0
  %v605 = vadd.f32 0.0, %v604
  %v606 = vpop.f32.mrf.mxu0
  %v607 = vpop.f32.mrf.mxu0
  %v608 = vadd.f32 0.0, %v607
  %v609 = vpop.f32.mrf.mxu0
  %610 = vmatprep.mubr.bf16.mxu0 0
  %611 = vmatmul.mubr.bf16.gmra.mxu0 %v344
  %v612 = vpop.f32.mrf.mxu0
  %v613 = vadd.f32 0.0, %v612
  %v614 = vpop.f32.mrf.mxu0
  %v615 = vpop.f32.mrf.mxu0
  %v616 = vadd.f32 0.0, %v615
  %v617 = vpop.f32.mrf.mxu0
  %618 = vmatprep.mubr.bf16.mxu0 0
  %619 = vmatmul.mubr.bf16.gmra.mxu0 %v347
  %v620 = vpop.f32.mrf.mxu0
  %v621 = vadd.f32 0.0, %v620
  %v622 = vpop.f32.mrf.mxu0
  %v623 = vpop.f32.mrf.mxu0
  %v624 = vadd.f32 0.0, %v623
  %v625 = vpop.f32.mrf.mxu0
  %626 = vmatprep.mubr.bf16.mxu0 0
  %627 = vmatmul.mubr.bf16.gmra.mxu0 %v350
  %v628 = vpop.f32.mrf.mxu0
  %v629 = vadd.f32 0.0, %v628
  %v630 = vpop.f32.mrf.mxu0
  %v631 = vpop.f32.mrf.mxu0
  %v632 = vadd.f32 0.0, %v631
  %v633 = vpop.f32.mrf.mxu0
  %634 = vmatprep.mubr.bf16.mxu0 0
  %635 = vmatmul.mubr.bf16.gmra.mxu0 %v353
  %v636 = vpop.f32.mrf.mxu0
  %v637 = vadd.f32 0.0, %v636
  %v638 = vpop.f32.mrf.mxu0
  %v639 = vpop.f32.mrf.mxu0
  %v640 = vadd.f32 0.0, %v639
  %v641 = vpop.f32.mrf.mxu0
  %642 = vmatprep.mubr.bf16.mxu0 0
  %643 = vmatmul.mubr.bf16.gmra.mxu0 %v356
  %v644 = vpop.f32.mrf.mxu0
  %v645 = vadd.f32 0.0, %v644
  %v646 = vpop.f32.mrf.mxu0
  %v647 = vpop.f32.mrf.mxu0
  %v648 = vadd.f32 0.0, %v647
  %v649 = vpop.f32.mrf.mxu0
  %650 = vdwg.mxu0
  %v651 = vld [vmem:[%s2] sm:$0x1]
  %v653 = vlaneseq
  %v654 = vshrl.u32 %v653, 7
  %v655 = vsub.s32 0, %v654
  %v656 = vrot.slane %v651, %v655
  %v658 = vmul.f32 %v397, %v656
  %v659 = vmul.f32 %v400, %v656
  %v660 = vmul.f32 %v405, %v656
  %v661 = vmul.f32 %v408, %v656
  %v662 = vmul.f32 %v413, %v656
  %v663 = vmul.f32 %v416, %v656
  %v664 = vmul.f32 %v421, %v656
  %v665 = vmul.f32 %v424, %v656
  %v666 = vmul.f32 %v429, %v656
  %v667 = vmul.f32 %v432, %v656
  %v668 = vmul.f32 %v437, %v656
  %v669 = vmul.f32 %v440, %v656
  %v670 = vmul.f32 %v445, %v656
  %v671 = vmul.f32 %v448, %v656
  %v672 = vmul.f32 %v453, %v656
  %v673 = vmul.f32 %v456, %v656
  %v674 = vmul.f32 %v461, %v656
  %v675 = vmul.f32 %v464, %v656
  %v676 = vmul.f32 %v469, %v656
  %v677 = vmul.f32 %v472, %v656
  %v678 = vmul.f32 %v477, %v656
  %v679 = vmul.f32 %v480, %v656
  %v680 = vmul.f32 %v485, %v656
  %v681 = vmul.f32 %v488, %v656
  %v682 = vmul.f32 %v493, %v656
  %v683 = vmul.f32 %v496, %v656
  %v684 = vmul.f32 %v501, %v656
  %v685 = vmul.f32 %v504, %v656
  %v686 = vmul.f32 %v509, %v656
  %v687 = vmul.f32 %v512, %v656
  %v688 = vmul.f32 %v517, %v656
  %v689 = vmul.f32 %v520, %v656
  %v690 = vmul.f32 %v525, %v656
  %v691 = vmul.f32 %v528, %v656
  %v692 = vmul.f32 %v533, %v656
  %v693 = vmul.f32 %v536, %v656
  %v694 = vmul.f32 %v541, %v656
  %v695 = vmul.f32 %v544, %v656
  %v696 = vmul.f32 %v549, %v656
  %v697 = vmul.f32 %v552, %v656
  %v698 = vmul.f32 %v557, %v656
  %v699 = vmul.f32 %v560, %v656
  %v700 = vmul.f32 %v565, %v656
  %v701 = vmul.f32 %v568, %v656
  %v702 = vmul.f32 %v573, %v656
  %v703 = vmul.f32 %v576, %v656
  %v704 = vmul.f32 %v581, %v656
  %v705 = vmul.f32 %v584, %v656
  %v706 = vmul.f32 %v589, %v656
  %v707 = vmul.f32 %v592, %v656
  %v708 = vmul.f32 %v597, %v656
  %v709 = vmul.f32 %v600, %v656
  %v710 = vmul.f32 %v605, %v656
  %v711 = vmul.f32 %v608, %v656
  %v712 = vmul.f32 %v613, %v656
  %v713 = vmul.f32 %v616, %v656
  %v714 = vmul.f32 %v621, %v656
  %v715 = vmul.f32 %v624, %v656
  %v716 = vmul.f32 %v629, %v656
  %v717 = vmul.f32 %v632, %v656
  %v718 = vmul.f32 %v637, %v656
  %v719 = vmul.f32 %v640, %v656
  %v720 = vmul.f32 %v645, %v656
  %v721 = vmul.f32 %v648, %v656
  %722 = vst [vmem:[%s3] sm:$0xff] %v658
  %723 = vst [vmem:[%s3 + $0x8] sm:$0xff] %v659
  %724 = vst [vmem:[%s3 + $0x10] sm:$0xff] %v660
  %725 = vst [vmem:[%s3 + $0x18] sm:$0xff] %v661
  %726 = vst [vmem:[%s3 + $0x20] sm:$0xff] %v662
  %727 = vst [vmem:[%s3 + $0x28] sm:$0xff] %v663
  %728 = vst [vmem:[%s3 + $0x30] sm:$0xff] %v664
  %729 = vst [vmem:[%s3 + $0x38] sm:$0xff] %v665
  %730 = vst [vmem:[%s3 + $0x40] sm:$0xff] %v666
  %731 = vst [vmem:[%s3 + $0x48] sm:$0xff] %v667
  %732 = vst [vmem:[%s3 + $0x50] sm:$0xff] %v668
  %733 = vst [vmem:[%s3 + $0x58] sm:$0xff] %v669
  %734 = vst [vmem:[%s3 + $0x60] sm:$0xff] %v670
  %735 = vst [vmem:[%s3 + $0x68] sm:$0xff] %v671
  %736 = vst [vmem:[%s3 + $0x70] sm:$0xff] %v672
  %737 = vst [vmem:[%s3 + $0x78] sm:$0xff] %v673
  %738 = vst [vmem:[%s3 + $0x80] sm:$0xff] %v674
  %739 = vst [vmem:[%s3 + $0x88] sm:$0xff] %v675
  %740 = vst [vmem:[%s3 + $0x90] sm:$0xff] %v676
  %741 = vst [vmem:[%s3 + $0x98] sm:$0xff] %v677
  %742 = vst [vmem:[%s3 + $0xa0] sm:$0xff] %v678
  %743 = vst [vmem:[%s3 + $0xa8] sm:$0xff] %v679
  %744 = vst [vmem:[%s3 + $0xb0] sm:$0xff] %v680
  %745 = vst [vmem:[%s3 + $0xb8] sm:$0xff] %v681
  %746 = vst [vmem:[%s3 + $0xc0] sm:$0xff] %v682
  %747 = vst [vmem:[%s3 + $0xc8] sm:$0xff] %v683
  %748 = vst [vmem:[%s3 + $0xd0] sm:$0xff] %v684
  %749 = vst [vmem:[%s3 + $0xd8] sm:$0xff] %v685
  %750 = vst [vmem:[%s3 + $0xe0] sm:$0xff] %v686
  %751 = vst [vmem:[%s3 + $0xe8] sm:$0xff] %v687
  %752 = vst [vmem:[%s3 + $0xf0] sm:$0xff] %v688
  %753 = vst [vmem:[%s3 + $0xf8] sm:$0xff] %v689
  %754 = vst [vmem:[%s3 + $0x100] sm:$0xff] %v690
  %755 = vst [vmem:[%s3 + $0x108] sm:$0xff] %v691
  %756 = vst [vmem:[%s3 + $0x110] sm:$0xff] %v692
  %757 = vst [vmem:[%s3 + $0x118] sm:$0xff] %v693
  %758 = vst [vmem:[%s3 + $0x120] sm:$0xff] %v694
  %759 = vst [vmem:[%s3 + $0x128] sm:$0xff] %v695
  %760 = vst [vmem:[%s3 + $0x130] sm:$0xff] %v696
  %761 = vst [vmem:[%s3 + $0x138] sm:$0xff] %v697
  %762 = vst [vmem:[%s3 + $0x140] sm:$0xff] %v698
  %763 = vst [vmem:[%s3 + $0x148] sm:$0xff] %v699
  %764 = vst [vmem:[%s3 + $0x150] sm:$0xff] %v700
  %765 = vst [vmem:[%s3 + $0x158] sm:$0xff] %v701
  %766 = vst [vmem:[%s3 + $0x160] sm:$0xff] %v702
  %767 = vst [vmem:[%s3 + $0x168] sm:$0xff] %v703
  %768 = vst [vmem:[%s3 + $0x170] sm:$0xff] %v704
  %769 = vst [vmem:[%s3 + $0x178] sm:$0xff] %v705
  %770 = vst [vmem:[%s3 + $0x180] sm:$0xff] %v706
  %771 = vst [vmem:[%s3 + $0x188] sm:$0xff] %v707
  %772 = vst [vmem:[%s3 + $0x190] sm:$0xff] %v708
  %773 = vst [vmem:[%s3 + $0x198] sm:$0xff] %v709
  %774 = vst [vmem:[%s3 + $0x1a0] sm:$0xff] %v710
  %775 = vst [vmem:[%s3 + $0x1a8] sm:$0xff] %v711
  %776 = vst [vmem:[%s3 + $0x1b0] sm:$0xff] %v712
  %777 = vst [vmem:[%s3 + $0x1b8] sm:$0xff] %v713
  %778 = vst [vmem:[%s3 + $0x1c0] sm:$0xff] %v714
  %779 = vst [vmem:[%s3 + $0x1c8] sm:$0xff] %v715
  %780 = vst [vmem:[%s3 + $0x1d0] sm:$0xff] %v716
  %781 = vst [vmem:[%s3 + $0x1d8] sm:$0xff] %v717
  %782 = vst [vmem:[%s3 + $0x1e0] sm:$0xff] %v718
  %783 = vst [vmem:[%s3 + $0x1e8] sm:$0xff] %v719
  %784 = vst [vmem:[%s3 + $0x1f0] sm:$0xff] %v720
  %785 = vst [vmem:[%s3 + $0x1f8] sm:$0xff] %v721
  %v786 = vadd.f32 %v658, %v659
  %v787 = vadd.f32 %v786, %v660
  %v788 = vadd.f32 %v787, %v661
  %v789 = vadd.f32 %v788, %v662
  %v790 = vadd.f32 %v789, %v663
  %v791 = vadd.f32 %v790, %v664
  %v792 = vadd.f32 %v791, %v665
  %v793 = vadd.f32 %v792, %v666
  %v794 = vadd.f32 %v793, %v667
  %v795 = vadd.f32 %v794, %v668
  %v796 = vadd.f32 %v795, %v669
  %v797 = vadd.f32 %v796, %v670
  %v798 = vadd.f32 %v797, %v671
  %v799 = vadd.f32 %v798, %v672
  %v800 = vadd.f32 %v799, %v673
  %v801 = vadd.f32 %v800, %v674
  %v802 = vadd.f32 %v801, %v675
  %v803 = vadd.f32 %v802, %v676
  %v804 = vadd.f32 %v803, %v677
  %v805 = vadd.f32 %v804, %v678
  %v806 = vadd.f32 %v805, %v679
  %v807 = vadd.f32 %v806, %v680
  %v808 = vadd.f32 %v807, %v681
  %v809 = vadd.f32 %v808, %v682
  %v810 = vadd.f32 %v809, %v683
  %v811 = vadd.f32 %v810, %v684
  %v812 = vadd.f32 %v811, %v685
  %v813 = vadd.f32 %v812, %v686
  %v814 = vadd.f32 %v813, %v687
  %v815 = vadd.f32 %v814, %v688
  %v816 = vadd.f32 %v815, %v689
  %v817 = vadd.f32 %v816, %v690
  %v818 = vadd.f32 %v817, %v691
  %v819 = vadd.f32 %v818, %v692
  %v820 = vadd.f32 %v819, %v693
  %v821 = vadd.f32 %v820, %v694
  %v822 = vadd.f32 %v821, %v695
  %v823 = vadd.f32 %v822, %v696
  %v824 = vadd.f32 %v823, %v697
  %v825 = vadd.f32 %v824, %v698
  %v826 = vadd.f32 %v825, %v699
  %v827 = vadd.f32 %v826, %v700
  %v828 = vadd.f32 %v827, %v701
  %v829 = vadd.f32 %v828, %v702
  %v830 = vadd.f32 %v829, %v703
  %v831 = vadd.f32 %v830, %v704
  %v832 = vadd.f32 %v831, %v705
  %v833 = vadd.f32 %v832, %v706
  %v834 = vadd.f32 %v833, %v707
  %v835 = vadd.f32 %v834, %v708
  %v836 = vadd.f32 %v835, %v709
  %v837 = vadd.f32 %v836, %v710
  %v838 = vadd.f32 %v837, %v711
  %v839 = vadd.f32 %v838, %v712
  %v840 = vadd.f32 %v839, %v713
  %v841 = vadd.f32 %v840, %v714
  %v842 = vadd.f32 %v841, %v715
  %v843 = vadd.f32 %v842, %v716
  %v844 = vadd.f32 %v843, %v717
  %v845 = vadd.f32 %v844, %v718
  %v846 = vadd.f32 %v845, %v719
  %v847 = vadd.f32 %v846, %v720
  %v848 = vadd.f32 %v847, %v721
  %v849 = vrot.slane %v848, 4
  %v850 = vadd.f32 %v848, %v849
  %v851 = vrot.slane %v850, 2
  %v852 = vadd.f32 %v850, %v851
  %v853 = vrot.slane %v852, 1
  %v854 = vadd.f32 %v852, %v853
  %v855 = vmul.f32 %v658, %v658
  %v856 = vmul.f32 %v659, %v659
  %v857 = vmul.f32 %v660, %v660
  %v858 = vmul.f32 %v661, %v661
  %v859 = vmul.f32 %v662, %v662
  %v860 = vmul.f32 %v663, %v663
  %v861 = vmul.f32 %v664, %v664
  %v862 = vmul.f32 %v665, %v665
  %v863 = vmul.f32 %v666, %v666
  %v864 = vmul.f32 %v667, %v667
  %v865 = vmul.f32 %v668, %v668
  %v866 = vmul.f32 %v669, %v669
  %v867 = vmul.f32 %v670, %v670
  %v868 = vmul.f32 %v671, %v671
  %v869 = vmul.f32 %v672, %v672
  %v870 = vmul.f32 %v673, %v673
  %v871 = vmul.f32 %v674, %v674
  %v872 = vmul.f32 %v675, %v675
  %v873 = vmul.f32 %v676, %v676
  %v874 = vmul.f32 %v677, %v677
  %v875 = vmul.f32 %v678, %v678
  %v876 = vmul.f32 %v679, %v679
  %v877 = vmul.f32 %v680, %v680
  %v878 = vmul.f32 %v681, %v681
  %v879 = vmul.f32 %v682, %v682
  %v880 = vmul.f32 %v683, %v683
  %v881 = vmul.f32 %v684, %v684
  %v882 = vmul.f32 %v685, %v685
  %v883 = vmul.f32 %v686, %v686
  %v884 = vmul.f32 %v687, %v687
  %v885 = vmul.f32 %v688, %v688
  %v886 = vmul.f32 %v689, %v689
  %v887 = vmul.f32 %v690, %v690
  %v888 = vmul.f32 %v691, %v691
  %v889 = vmul.f32 %v692, %v692
  %v890 = vmul.f32 %v693, %v693
  %v891 = vmul.f32 %v694, %v694
  %v892 = vmul.f32 %v695, %v695
  %v893 = vmul.f32 %v696, %v696
  %v894 = vmul.f32 %v697, %v697
  %v895 = vmul.f32 %v698, %v698
  %v896 = vmul.f32 %v699, %v699
  %v897 = vmul.f32 %v700, %v700
  %v898 = vmul.f32 %v701, %v701
  %v899 = vmul.f32 %v702, %v702
  %v900 = vmul.f32 %v703, %v703
  %v901 = vmul.f32 %v704, %v704
  %v902 = vmul.f32 %v705, %v705
  %v903 = vmul.f32 %v706, %v706
  %v904 = vmul.f32 %v707, %v707
  %v905 = vmul.f32 %v708, %v708
  %v906 = vmul.f32 %v709, %v709
  %v907 = vmul.f32 %v710, %v710
  %v908 = vmul.f32 %v711, %v711
  %v909 = vmul.f32 %v712, %v712
  %v910 = vmul.f32 %v713, %v713
  %v911 = vmul.f32 %v714, %v714
  %v912 = vmul.f32 %v715, %v715
  %v913 = vmul.f32 %v716, %v716
  %v914 = vmul.f32 %v717, %v717
  %v915 = vmul.f32 %v718, %v718
  %v916 = vmul.f32 %v719, %v719
  %v917 = vmul.f32 %v720, %v720
  %v918 = vmul.f32 %v721, %v721
  %v919 = vadd.f32 %v855, %v856
  %v920 = vadd.f32 %v919, %v857
  %v921 = vadd.f32 %v920, %v858
  %v922 = vadd.f32 %v921, %v859
  %v923 = vadd.f32 %v922, %v860
  %v924 = vadd.f32 %v923, %v861
  %v925 = vadd.f32 %v924, %v862
  %v926 = vadd.f32 %v925, %v863
  %v927 = vadd.f32 %v926, %v864
  %v928 = vadd.f32 %v927, %v865
  %v929 = vadd.f32 %v928, %v866
  %v930 = vadd.f32 %v929, %v867
  %v931 = vadd.f32 %v930, %v868
  %v932 = vadd.f32 %v931, %v869
  %v933 = vadd.f32 %v932, %v870
  %v934 = vadd.f32 %v933, %v871
  %v935 = vadd.f32 %v934, %v872
  %v936 = vadd.f32 %v935, %v873
  %v937 = vadd.f32 %v936, %v874
  %v938 = vadd.f32 %v937, %v875
  %v939 = vadd.f32 %v938, %v876
  %v940 = vadd.f32 %v939, %v877
  %v941 = vadd.f32 %v940, %v878
  %v942 = vadd.f32 %v941, %v879
  %v943 = vadd.f32 %v942, %v880
  %v944 = vadd.f32 %v943, %v881
  %v945 = vadd.f32 %v944, %v882
  %v946 = vadd.f32 %v945, %v883
  %v947 = vadd.f32 %v946, %v884
  %v948 = vadd.f32 %v947, %v885
  %v949 = vadd.f32 %v948, %v886
  %v950 = vadd.f32 %v949, %v887
  %v951 = vadd.f32 %v950, %v888
  %v952 = vadd.f32 %v951, %v889
  %v953 = vadd.f32 %v952, %v890
  %v954 = vadd.f32 %v953, %v891
  %v955 = vadd.f32 %v954, %v892
  %v956 = vadd.f32 %v955, %v893
  %v957 = vadd.f32 %v956, %v894
  %v958 = vadd.f32 %v957, %v895
  %v959 = vadd.f32 %v958, %v896
  %v960 = vadd.f32 %v959, %v897
  %v961 = vadd.f32 %v960, %v898
  %v962 = vadd.f32 %v961, %v899
  %v963 = vadd.f32 %v962, %v900
  %v964 = vadd.f32 %v963, %v901
  %v965 = vadd.f32 %v964, %v902
  %v966 = vadd.f32 %v965, %v903
  %v967 = vadd.f32 %v966, %v904
  %v968 = vadd.f32 %v967, %v905
  %v969 = vadd.f32 %v968, %v906
  %v970 = vadd.f32 %v969, %v907
  %v971 = vadd.f32 %v970, %v908
  %v972 = vadd.f32 %v971, %v909
  %v973 = vadd.f32 %v972, %v910
  %v974 = vadd.f32 %v973, %v911
  %v975 = vadd.f32 %v974, %v912
  %v976 = vadd.f32 %v975, %v913
  %v977 = vadd.f32 %v976, %v914
  %v978 = vadd.f32 %v977, %v915
  %v979 = vadd.f32 %v978, %v916
  %v980 = vadd.f32 %v979, %v917
  %v981 = vadd.f32 %v980, %v918
  %v982 = vrot.slane %v981, 4
  %v983 = vadd.f32 %v981, %v982
  %v984 = vrot.slane %v983, 2
  %v985 = vadd.f32 %v983, %v984
  %v986 = vrot.slane %v985, 1
  %v987 = vadd.f32 %v985, %v986
  %vm988 = vcmask 1040384
  %v989 = vsel %vm988, %v854, %v987
  %990 = vst [vmem:[%s4] sm:$0x3] %v989
  // Predicated region
  $region14: #{_conv_bn_relu.2} parent=0 // pred_check
    _
  $region15: #{_conv_bn_relu.2} parent=0 // pred_check_branch
    %992 = sbr.rel (0) target = $region17
  $region16: #{_conv_bn_relu.2} parent=0 // pred_region
    _
  $region17: #{_conv_bn_relu.2} parent=0 // pred_fallthru
    _
  // Predicated region
  $region18: #{_conv_bn_relu.2} parent=0 // pred_check
    _
  $region19: #{_conv_bn_relu.2} parent=0 // pred_check_branch
    %994 = sbr.rel (0) target = $region21
  $region20: #{_conv_bn_relu.2} parent=0 // pred_region
    _
  $region21: #{_conv_bn_relu.2} parent=0 // pred_fallthru
    _
  // Predicated region
  $region22: #{_conv_bn_relu.2} parent=0 // pred_check
    _
  $region23: #{_conv_bn_relu.2} parent=0 // pred_check_branch
    %996 = sbr.rel (0) target = $region25
  $region24: #{_conv_bn_relu.2} parent=0 // pred_region
    _
  $region25: #{_conv_bn_relu.2} parent=0 // pred_fallthru
    _
  // Predicated region
  $region26: #{_conv_bn_relu.2} parent=0 // pred_check
    _
  $region27: #{_conv_bn_relu.2} parent=0 // pred_check_branch
    %998 = sbr.rel (0) target = $region29
  $region28: #{_conv_bn_relu.2} parent=0 // pred_region
    _
  $region29: #{_conv_bn_relu.2} parent=0 // pred_fallthru
    _

</llo_original>
